<compile_context>
chip_gen: v7x
topology: tpu7x:2x2x1
jax: 0.10.0
libtpu: 0.0.40
codegen_flags: <defaults>
</compile_context>

<pallas_src>
import jax
import jax.numpy as jnp
from jax.experimental import pallas as pl
from jax.experimental.pallas import tpu as pltpu


def _round8(n):
    return -(-n // 8) * 8


def _pack_rows(blocks, width):
    """Stack 2-D blocks vertically into one (rows, width) f32 slab, each block
    starting at an 8-aligned (sublane-aligned) row offset.  Returns
    (slab, offsets).  One-time wrapper glue; hoist out of the step loop when
    the contents (weights / graph) are reused across calls."""
    offsets, rows = [], 0
    for b in blocks:
        offsets.append(rows)
        rows += _round8(b.shape[0])
    slab = jnp.zeros((rows, width), jnp.float32)
    for off, b in zip(offsets, blocks):
        slab = slab.at[off:off + b.shape[0], :b.shape[1]].set(b.astype(jnp.float32))
    return slab, offsets


def run_sengraph(index, label, feat, wg_t, bg, adj, sent, wfc_t, bfc):
    N, F = feat.shape
    H = wg_t.shape[1]
    B = index.shape[1]
    C = wfc_t.shape[1]

    # ---- wrapper-side packing (one-time XLA ops): biases folded into
    # augmented operands; everything packed into two lane-dense VMEM slabs. ----
    feat_aug = jnp.concatenate([feat, jnp.ones((N, 1), jnp.float32)], axis=1)   # (N, F+1)
    wg_aug = jnp.concatenate([wg_t, bg.reshape(1, H)], axis=0)                  # (F+1, H)
    sent_aug = jnp.concatenate([sent, jnp.ones((B, 1), jnp.float32)], axis=1)   # (B, H+1)
    wfc_aug = jnp.concatenate([wfc_t, bfc.reshape(1, C)], axis=0)               # (3H+1, C)

    act_slab, (o_feat, o_adj, o_sent) = _pack_rows(
        [feat_aug, adj, sent_aug], max(F + 1, N, H + 1))
    w_slab, (o_wg, o_wfc) = _pack_rows([wg_aug, wfc_aug], max(H, C))

    def kernel(idx_ref, lab_ref,      # SMEM scalar prefetch: (2B,), (B,) int32
               act_ref, w_ref,        # VMEM packed slabs
               loss_ref, out_ref):    # SMEM (1,1), VMEM (B,C)
        # Static views into the packed slabs (8-aligned row offsets).
        feat_a = act_ref[o_feat:o_feat + N, 0:F + 1]            # (N, F+1)
        adj_m = act_ref[o_adj:o_adj + N, 0:N]                   # (N, N)
        sent_a = act_ref[o_sent:o_sent + B, 0:H + 1]            # (B, H+1)
        wg_a = w_ref[o_wg:o_wg + F + 1, 0:H]                    # (F+1, H)
        w1 = w_ref[o_wfc:o_wfc + H, 0:C]                        # (H, C)
        w2 = w_ref[o_wfc + H:o_wfc + 2 * H, 0:C]                # (H, C)
        w3_a = w_ref[o_wfc + 2 * H:o_wfc + 3 * H + 1, 0:C]      # (H+1, C)

        # GCN linear (bias folded) + symmetric-norm propagate.   (MXU)
        h = jnp.dot(feat_a, wg_a, preferred_element_type=jnp.float32)   # (N, H)
        g = jnp.dot(adj_m, h, preferred_element_type=jnp.float32)       # (N, H)

        # take_logtis: one-hot selectors built from SMEM indices (pure VPU —
        # no dynamic sublane slices, no concats, no scratch round-trip).
        lane_n = jax.lax.broadcasted_iota(jnp.int32, (B, N), 1)
        sub_b = jax.lax.broadcasted_iota(jnp.int32, (B, N), 0)
        sel1 = jnp.zeros((B, N), jnp.float32)
        sel2 = jnp.zeros((B, N), jnp.float32)
        for b in range(B):
            row_b = sub_b == b
            sel1 = jnp.where(row_b & (lane_n == idx_ref[b]), 1.0, sel1)
            sel2 = jnp.where(row_b & (lane_n == idx_ref[B + b]), 1.0, sel2)
        e1 = jnp.dot(sel1, g, preferred_element_type=jnp.float32)       # (B, H)
        e2 = jnp.dot(sel2, g, preferred_element_type=jnp.float32)       # (B, H)

        # class_fc(cat([e1, e2, sent])) with the weight pre-split per segment:
        # no lane concat; bias folded into w3_a's last row.       (MXU)
        logits = (jnp.dot(e1, w1, preferred_element_type=jnp.float32)
                  + jnp.dot(e2, w2, preferred_element_type=jnp.float32)
                  + jnp.dot(sent_a, w3_a, preferred_element_type=jnp.float32))
        out_ref[...] = logits                                            # (B, C)

        # CrossEntropyLoss (mean reduction), vectorized label pick.
        m = jnp.max(logits, axis=1, keepdims=True)                       # (B, 1)
        lse = m + jnp.log(jnp.sum(jnp.exp(logits - m), axis=1, keepdims=True))
        lane_c = jax.lax.broadcasted_iota(jnp.int32, (B, C), 1)
        sub_c = jax.lax.broadcasted_iota(jnp.int32, (B, C), 0)
        lab_bc = jnp.full((B, C), -1, jnp.int32)
        for b in range(B):
            lab_bc = jnp.where(sub_c == b, lab_ref[b], lab_bc)
        picked = jnp.sum(jnp.where(lane_c == lab_bc, logits, 0.0),
                         axis=1, keepdims=True)                          # (B, 1)
        loss_ref[0, 0] = jnp.sum(lse - picked) * jnp.float32(1.0 / B)

    vmem = pl.BlockSpec(memory_space=pltpu.MemorySpace.VMEM)
    smem = pl.BlockSpec(memory_space=pltpu.MemorySpace.SMEM)
    grid_spec = pltpu.PrefetchScalarGridSpec(
        num_scalar_prefetch=2,          # flattened index (2B,), label (B,) -> SMEM
        grid=(),
        in_specs=[vmem, vmem],          # two packed slabs -> two input DMAs
        out_specs=(smem, vmem),
    )
    cost = pl.CostEstimate(
        flops=2 * (N * (F + 1) * H + N * N * H + 2 * B * N * H
                   + 2 * B * H * C + B * (H + 1) * C),
        transcendentals=B * (C + 1),
        bytes_accessed=4 * (act_slab.size + w_slab.size + B * C + 1 + 3 * B),
    )
    loss, out = pl.pallas_call(
        kernel,
        out_shape=(jax.ShapeDtypeStruct((1, 1), jnp.float32),
                   jax.ShapeDtypeStruct((B, C), jnp.float32)),
        grid_spec=grid_spec,
        cost_estimate=cost,
    )(index.reshape(2 * B).astype(jnp.int32), label.astype(jnp.int32),
      act_slab, w_slab)
    return loss[0, 0], out


def build_norm_adjacency(edge_index, num_nodes):
    """Dense normalized adjacency replicating PyG GCNConv semantics:
       add self loops, deg over source nodes, out[col] += dinv[row]*dinv[col]*h[row]."""
    self_loops = jnp.stack([jnp.arange(num_nodes), jnp.arange(num_nodes)])
    ei = jnp.concatenate([edge_index, self_loops], axis=1)
    row, col = ei[0], ei[1]
    deg = jnp.zeros((num_nodes,), jnp.float32).at[row].add(1.0)
    dinv = deg ** -0.5
    norm = dinv[row] * dinv[col]
    adj = jnp.zeros((num_nodes, num_nodes), jnp.float32).at[col, row].add(norm)
    return adj


if __name__ == "__main__":
    # Small, self-consistent shapes.
    N, F, H, C = 16, 32, 32, 4     # nodes, nfeature, nhidden, num_class
    B, S, V, E = 2, 8, 50, 24      # batch, seq len, proxy vocab, num edges

    key = jax.random.PRNGKey(0)
    ks = jax.random.split(key, 12)

    # Module inputs.
    features = jax.random.normal(ks[0], (N, F), jnp.float32)
    edges = jax.random.randint(ks[1], (2, E), 0, N)
    index = jax.random.randint(ks[2], (2, B), 0, N)           # two entity index vectors
    label = jax.random.randint(ks[3], (B,), 0, C)
    tok_ids = jax.random.randint(ks[4], (B, S), 0, V)
    attn_mask = jnp.concatenate(
        [jnp.ones((B, S // 2), jnp.int32), jnp.zeros((B, S - S // 2), jnp.int32)], axis=1)
    sentence_mask = jnp.stack([tok_ids, attn_mask], axis=1)    # (B, 2, S) like PyTorch

    # Deterministic parameters (shapes from the module __init__).
    wg = jax.random.normal(ks[5], (H, F), jnp.float32) * 0.1       # gcn.lin.weight
    bg = jax.random.normal(ks[6], (H,), jnp.float32) * 0.1         # gcn.lin.bias
    wfc = jax.random.normal(ks[7], (C, 3 * H), jnp.float32) * 0.1  # class_fc.weight
    bfc = jax.random.normal(ks[8], (C,), jnp.float32) * 0.1        # class_fc.bias
    emb = jax.random.normal(ks[9], (V, H), jnp.float32) * 0.1      # BERT proxy embedding

    # Glue: dense normalized adjacency and BERT-proxy sentence encoding.
    adj = build_norm_adjacency(edges, N)
    mask_f = sentence_mask[:, 1, :].astype(jnp.float32)
    # TODO(synk): BertModel CLS encoder replaced by masked-mean embedding proxy.
    sent = (jnp.einsum("bs,bsh->bh", mask_f, emb[sentence_mask[:, 0, :]])
            / jnp.maximum(mask_f.sum(axis=1, keepdims=True), 1.0))   # (B, H)

    loss, out = run_sengraph(index, label, features, wg.T, bg, adj, sent, wfc.T, bfc)
    jax.block_until_ready((loss, out))

    # Pure-JAX reference for validation.
    h_np = features @ wg.T + bg
    g_np = adj @ h_np
    cat_np = jnp.concatenate([g_np[index[0]], g_np[index[1]], sent], axis=1)
    out_np = cat_np @ wfc.T + bfc
    logp = out_np - jax.scipy.special.logsumexp(out_np, axis=1, keepdims=True)
    loss_np = -jnp.mean(logp[jnp.arange(B), label])

    assert jnp.allclose(out, out_np, atol=1e-4, rtol=1e-4), "logits mismatch"
    assert jnp.allclose(loss, loss_np, atol=1e-4, rtol=1e-4), "loss mismatch"
    print("KERNEL_OK")
</pallas_src>

<mosaic_0001>
module attributes {stable_mosaic.version = 11 : i64} {
  func.func @kernel(%arg0: memref<4xi32, #tpu.memory_space<smem>>, %arg1: memref<2xi32, #tpu.memory_space<smem>>, %arg2: memref<40x33xf32, #tpu.memory_space<vmem>>, %arg3: memref<144x32xf32, #tpu.memory_space<vmem>>, %arg4: memref<1x1xf32, #tpu.memory_space<smem>>, %arg5: memref<2x4xf32, #tpu.memory_space<vmem>>) attributes {dimension_semantics = [], scalar_prefetch = 2 : i64, scratch_operands = 0 : i64, tpu.core_type = #tpu.core_type<tc>} {
    %c0 = arith.constant 0 : index
    %c0_0 = arith.constant 0 : index
    %0 = vector.load %arg2[%c0, %c0_0] : memref<40x33xf32, #tpu.memory_space<vmem>>, vector<16x33xf32>
    %c16 = arith.constant 16 : index
    %c0_1 = arith.constant 0 : index
    %1 = vector.load %arg2[%c16, %c0_1] : memref<40x33xf32, #tpu.memory_space<vmem>>, vector<16x16xf32>
    %c32 = arith.constant 32 : index
    %c0_2 = arith.constant 0 : index
    %2 = vector.load %arg2[%c32, %c0_2] : memref<40x33xf32, #tpu.memory_space<vmem>>, vector<2x33xf32>
    %c0_3 = arith.constant 0 : index
    %c0_4 = arith.constant 0 : index
    %3 = vector.load %arg3[%c0_3, %c0_4] : memref<144x32xf32, #tpu.memory_space<vmem>>, vector<33x32xf32>
    %c40 = arith.constant 40 : index
    %c0_5 = arith.constant 0 : index
    %4 = vector.load %arg3[%c40, %c0_5] : memref<144x32xf32, #tpu.memory_space<vmem>>, vector<32x4xf32>
    %c72 = arith.constant 72 : index
    %c0_6 = arith.constant 0 : index
    %5 = vector.load %arg3[%c72, %c0_6] : memref<144x32xf32, #tpu.memory_space<vmem>>, vector<32x4xf32>
    %c104 = arith.constant 104 : index
    %c0_7 = arith.constant 0 : index
    %6 = vector.load %arg3[%c104, %c0_7] : memref<144x32xf32, #tpu.memory_space<vmem>>, vector<33x4xf32>
    %cst = arith.constant dense<0.000000e+00> : vector<16x32xf32>
    %7 = tpu.matmul %0, %3, %cst {dimension_numbers = #tpu.dot_dimension_numbers<[1], [0], [0], [1], [0, 0, 1, 1], [], []>} : vector<16x33xf32>, vector<33x32xf32>, vector<16x32xf32> -> vector<16x32xf32>
    %cst_8 = arith.constant dense<0.000000e+00> : vector<16x32xf32>
    %8 = tpu.matmul %1, %7, %cst_8 {dimension_numbers = #tpu.dot_dimension_numbers<[1], [0], [0], [1], [0, 0, 1, 1], [], []>} : vector<16x16xf32>, vector<16x32xf32>, vector<16x32xf32> -> vector<16x32xf32>
    %9 = tpu.iota {dimensions = array<i32: 1>} : vector<2x16xi32>
    %10 = tpu.iota {dimensions = array<i32: 0>} : vector<2x16xi32>
    %cst_9 = arith.constant 0.000000e+00 : f32
    %11 = vector.broadcast %cst_9 : f32 to vector<2x16xf32>
    %cst_10 = arith.constant 0.000000e+00 : f32
    %12 = vector.broadcast %cst_10 : f32 to vector<2x16xf32>
    %c0_i32 = arith.constant 0 : i32
    %13 = vector.broadcast %c0_i32 : i32 to vector<2x16xi32>
    %14 = arith.cmpi eq, %10, %13 : vector<2x16xi32>
    %c0_11 = arith.constant 0 : index
    %15 = memref.load %arg0[%c0_11] : memref<4xi32, #tpu.memory_space<smem>>
    %16 = vector.broadcast %15 : i32 to vector<2x16xi32>
    %17 = arith.cmpi eq, %9, %16 : vector<2x16xi32>
    %18 = arith.andi %14, %17 : vector<2x16xi1>
    %cst_12 = arith.constant 1.000000e+00 : f32
    %19 = vector.broadcast %cst_12 : f32 to vector<2x16xf32>
    %20 = arith.select %18, %19, %11 : vector<2x16xi1>, vector<2x16xf32>
    %c2 = arith.constant 2 : index
    %21 = memref.load %arg0[%c2] : memref<4xi32, #tpu.memory_space<smem>>
    %22 = vector.broadcast %21 : i32 to vector<2x16xi32>
    %23 = arith.cmpi eq, %9, %22 : vector<2x16xi32>
    %24 = arith.andi %14, %23 : vector<2x16xi1>
    %cst_13 = arith.constant 1.000000e+00 : f32
    %25 = vector.broadcast %cst_13 : f32 to vector<2x16xf32>
    %26 = arith.select %24, %25, %12 : vector<2x16xi1>, vector<2x16xf32>
    %c1_i32 = arith.constant 1 : i32
    %27 = vector.broadcast %c1_i32 : i32 to vector<2x16xi32>
    %28 = arith.cmpi eq, %10, %27 : vector<2x16xi32>
    %c1 = arith.constant 1 : index
    %29 = memref.load %arg0[%c1] : memref<4xi32, #tpu.memory_space<smem>>
    %30 = vector.broadcast %29 : i32 to vector<2x16xi32>
    %31 = arith.cmpi eq, %9, %30 : vector<2x16xi32>
    %32 = arith.andi %28, %31 : vector<2x16xi1>
    %cst_14 = arith.constant 1.000000e+00 : f32
    %33 = vector.broadcast %cst_14 : f32 to vector<2x16xf32>
    %34 = arith.select %32, %33, %20 : vector<2x16xi1>, vector<2x16xf32>
    %c3 = arith.constant 3 : index
    %35 = memref.load %arg0[%c3] : memref<4xi32, #tpu.memory_space<smem>>
    %36 = vector.broadcast %35 : i32 to vector<2x16xi32>
    %37 = arith.cmpi eq, %9, %36 : vector<2x16xi32>
    %38 = arith.andi %28, %37 : vector<2x16xi1>
    %cst_15 = arith.constant 1.000000e+00 : f32
    %39 = vector.broadcast %cst_15 : f32 to vector<2x16xf32>
    %40 = arith.select %38, %39, %26 : vector<2x16xi1>, vector<2x16xf32>
    %cst_16 = arith.constant dense<0.000000e+00> : vector<2x32xf32>
    %41 = tpu.matmul %34, %8, %cst_16 {dimension_numbers = #tpu.dot_dimension_numbers<[1], [0], [0], [1], [0, 0, 1, 1], [], []>} : vector<2x16xf32>, vector<16x32xf32>, vector<2x32xf32> -> vector<2x32xf32>
    %cst_17 = arith.constant dense<0.000000e+00> : vector<2x32xf32>
    %42 = tpu.matmul %40, %8, %cst_17 {dimension_numbers = #tpu.dot_dimension_numbers<[1], [0], [0], [1], [0, 0, 1, 1], [], []>} : vector<2x16xf32>, vector<16x32xf32>, vector<2x32xf32> -> vector<2x32xf32>
    %cst_18 = arith.constant dense<0.000000e+00> : vector<2x4xf32>
    %43 = tpu.matmul %41, %4, %cst_18 {dimension_numbers = #tpu.dot_dimension_numbers<[1], [0], [0], [1], [0, 0, 1, 1], [], []>} : vector<2x32xf32>, vector<32x4xf32>, vector<2x4xf32> -> vector<2x4xf32>
    %cst_19 = arith.constant dense<0.000000e+00> : vector<2x4xf32>
    %44 = tpu.matmul %42, %5, %cst_19 {dimension_numbers = #tpu.dot_dimension_numbers<[1], [0], [0], [1], [0, 0, 1, 1], [], []>} : vector<2x32xf32>, vector<32x4xf32>, vector<2x4xf32> -> vector<2x4xf32>
    %45 = arith.addf %43, %44 : vector<2x4xf32>
    %cst_20 = arith.constant dense<0.000000e+00> : vector<2x4xf32>
    %46 = tpu.matmul %2, %6, %cst_20 {dimension_numbers = #tpu.dot_dimension_numbers<[1], [0], [0], [1], [0, 0, 1, 1], [], []>} : vector<2x33xf32>, vector<33x4xf32>, vector<2x4xf32> -> vector<2x4xf32>
    %47 = arith.addf %45, %46 : vector<2x4xf32>
    %c0_21 = arith.constant 0 : index
    %c0_22 = arith.constant 0 : index
    %48 = vector.load %arg5[%c0_21, %c0_22] : memref<2x4xf32, #tpu.memory_space<vmem>>, vector<2x4xf32>
    tpu.vector_store %arg5[%c0_21, %c0_22], %47 {strides = array<i32>} : memref<2x4xf32, #tpu.memory_space<vmem>>, vector<2x4xf32>,
    %cst_23 = arith.constant dense<0xFF800000> : vector<2xf32>
    %49 = vector.multi_reduction <maximumf>, %47, %cst_23 [1] : vector<2x4xf32> to vector<2xf32>
    %50 = vector.shape_cast %49 : vector<2xf32> to vector<2x1xf32>
    %51 = vector.broadcast %50 : vector<2x1xf32> to vector<2x4xf32>
    %52 = arith.subf %47, %51 : vector<2x4xf32>
    %53 = math.exp %52 : vector<2x4xf32>
    %cst_24 = arith.constant dense<0.000000e+00> : vector<2xf32>
    %54 = vector.multi_reduction <add>, %53, %cst_24 [1] : vector<2x4xf32> to vector<2xf32>
    %55 = vector.shape_cast %54 : vector<2xf32> to vector<2x1xf32>
    %56 = math.log %55 : vector<2x1xf32>
    %57 = arith.addf %50, %56 : vector<2x1xf32>
    %58 = tpu.iota {dimensions = array<i32: 1>} : vector<2x4xi32>
    %59 = tpu.iota {dimensions = array<i32: 0>} : vector<2x4xi32>
    %c-1_i32 = arith.constant -1 : i32
    %60 = vector.broadcast %c-1_i32 : i32 to vector<2x4xi32>
    %c0_i32_25 = arith.constant 0 : i32
    %61 = vector.broadcast %c0_i32_25 : i32 to vector<2x4xi32>
    %62 = arith.cmpi eq, %59, %61 : vector<2x4xi32>
    %c0_26 = arith.constant 0 : index
    %63 = memref.load %arg1[%c0_26] : memref<2xi32, #tpu.memory_space<smem>>
    %64 = vector.broadcast %63 : i32 to vector<2x4xi32>
    %65 = arith.select %62, %64, %60 : vector<2x4xi1>, vector<2x4xi32>
    %c1_i32_27 = arith.constant 1 : i32
    %66 = vector.broadcast %c1_i32_27 : i32 to vector<2x4xi32>
    %67 = arith.cmpi eq, %59, %66 : vector<2x4xi32>
    %c1_28 = arith.constant 1 : index
    %68 = memref.load %arg1[%c1_28] : memref<2xi32, #tpu.memory_space<smem>>
    %69 = vector.broadcast %68 : i32 to vector<2x4xi32>
    %70 = arith.select %67, %69, %65 : vector<2x4xi1>, vector<2x4xi32>
    %71 = arith.cmpi eq, %58, %70 : vector<2x4xi32>
    %cst_29 = arith.constant 0.000000e+00 : f32
    %72 = vector.broadcast %cst_29 : f32 to vector<2x4xf32>
    %73 = arith.select %71, %47, %72 : vector<2x4xi1>, vector<2x4xf32>
    %cst_30 = arith.constant dense<0.000000e+00> : vector<2xf32>
    %74 = vector.multi_reduction <add>, %73, %cst_30 [1] : vector<2x4xf32> to vector<2xf32>
    %75 = vector.shape_cast %74 : vector<2xf32> to vector<2x1xf32>
    %76 = arith.subf %57, %75 : vector<2x1xf32>
    %77 = vector.shape_cast %76 : vector<2x1xf32> to vector<1x2x1xf32>
    %cst_31 = arith.constant dense<0.000000e+00> : vector<1xf32>
    %78 = vector.multi_reduction <add>, %77, %cst_31 [1, 2] : vector<1x2x1xf32> to vector<1xf32>
    %79 = vector.shape_cast %78 : vector<1xf32> to vector<1x1x1xf32>
    %80 = vector.extract %79[0, 0, 0] : f32 from vector<1x1x1xf32>
    %cst_32 = arith.constant 5.000000e-01 : f32
    %81 = arith.mulf %80, %cst_32 : f32
    %c0_33 = arith.constant 0 : index
    %c0_34 = arith.constant 0 : index
    %82 = memref.load %arg4[%c0_33, %c0_34] : memref<1x1xf32, #tpu.memory_space<smem>>
    memref.store %81, %arg4[%c0_33, %c0_34] : memref<1x1xf32, #tpu.memory_space<smem>>
    return
  }
}

</mosaic_0001>

<llo_original>
// kernel: tpu_custom_call.1
$region0: #{tpu_custom_call.1}
  #allocation0 [shape = 'u32[]', space=smem, size = 0x4, offset = 0x4, fixed_abs, tag = 'smem constant byte address 0x4 - core index']
  #allocation1 [shape = 'u32[144,128]{1,0:T(1,128)}', space=vmem, size = 0x12000, scoped, tag = 'internal scratch']
  #allocation2 [shape = 's32[1]{0}', space=sflag, size = 0x4, scoped, tag = 'scoped memory for tpu_custom_call.1']
  #allocation3 [shape = 'u8[512]{0}', space=smem, size = 0x200, scoped, tag = 'prefetched SMEM operand 0']
  #allocation4 [shape = 'u8[512]{0}', space=smem, size = 0x200, scoped, tag = 'prefetched SMEM operand 1']
  %s0 = inlined_call_operand.vmem [shape: s32[4], index: 0, kind: input, shape index: {}]
  %s1 = inlined_call_operand.vmem [shape: s32[2], index: 1, kind: input, shape index: {}]
  %s2 = inlined_call_operand.vmem [shape: f32[40,33], index: 2, kind: input, shape index: {}]
  %s3 = inlined_call_operand.vmem [shape: f32[144,32], index: 3, kind: input, shape index: {}]
  %s4 = inlined_call_operand.hbm [shape: f32[1,1], index: 4, kind: output, shape index: {0}]
  %s5 = inlined_call_operand.hbm [shape: f32[2,4], index: 5, kind: output, shape index: {1}]
  %6 = xla_tuple %s4, %s5
  %s7 = sld [smem:[#allocation0]]
  $region26: #{tpu_custom_call.1} parent=0
    _
  %s9 = ssub.s32 1, %s7
  %s10 = scalar_select 0, %s9, %s7
  %s11 = sshll.u32 %s0, 4
  %s12 = int_to_ptr.vmem [resolvable:$true] %s11
  %14 = dma.vmem_to_smem %s12, 16, [#allocation3], [#allocation2]
  %s15 = sshll.u32 %s1, 4
  %s16 = int_to_ptr.vmem [resolvable:$true] %s15
  %18 = dma.vmem_to_smem %s16, 16, [#allocation4], [#allocation2]
  %19 = dma.done [#allocation2], 32
  %20 = sfence
  $region1: #{tpu_custom_call.1} parent=0
    #allocation5 [shape = 'u8[512]{0}', space=smem, size = 0x200, scoped, tag = 'output window, operand 0, single buffered']
    #allocation6 [shape = 's32[1]{0}', space=sflag, size = 0x4, scoped, tag = 'scoped memory for tpu_custom_call.1']
    #allocation7 [shape = 's32[1]{0}', space=sflag, size = 0x4, scoped, tag = 'scoped memory for tpu_custom_call.1']
    #allocation8 [shape = 'u8[1024]{0}', space=vmem, size = 0x400, scoped, tag = 'output window, operand 1, single buffered']
    %21 = vsyncpa [#allocation7], 0
    %22 = vsyncpa [#allocation6], 0
    // Predicated region
    $region2: #{tpu_custom_call.1} parent=1 // pred_check
      _
    $region3: #{tpu_custom_call.1} parent=1 // pred_check_branch
      %24 = sbr.rel (0) target = $region5
    $region4: #{tpu_custom_call.1} parent=1 // pred_region
      _
    $region5: #{tpu_custom_call.1} parent=1 // pred_fallthru
      _
    // Predicated region
    $region6: #{tpu_custom_call.1} parent=1 // pred_check
      _
    $region7: #{tpu_custom_call.1} parent=1 // pred_check_branch
      %26 = sbr.rel (0) target = $region9
    $region8: #{tpu_custom_call.1} parent=1 // pred_region
      _
    $region9: #{tpu_custom_call.1} parent=1 // pred_fallthru
      _
    %v27 = vld [vmem:[%s2] sm:$0xff]
    %v28 = vld [vmem:[%s2 + $0x8] sm:$0xff]
    %v29 = vld [vmem:[%s2 + $0x10] sm:$0xff]
    %v30 = vld [vmem:[%s2 + $0x18] sm:$0xff]
    %v31 = vld [vmem:[%s2 + $0x20] sm:$0x3]
    %v32 = vld [vmem:[%s3] sm:$0xff]
    %v33 = vld [vmem:[%s3 + $0x8] sm:$0xff]
    %v34 = vld [vmem:[%s3 + $0x10] sm:$0xff]
    %v35 = vld [vmem:[%s3 + $0x18] sm:$0xff]
    %v36 = vld [vmem:[%s3 + $0x20] sm:$0x1]
    %v37 = vld [vmem:[%s3 + $0x28] sm:$0xff]
    %v38 = vld [vmem:[%s3 + $0x30] sm:$0xff]
    %v39 = vld [vmem:[%s3 + $0x38] sm:$0xff]
    %v40 = vld [vmem:[%s3 + $0x40] sm:$0xff]
    %v41 = vld [vmem:[%s3 + $0x48] sm:$0xff]
    %v42 = vld [vmem:[%s3 + $0x50] sm:$0xff]
    %v43 = vld [vmem:[%s3 + $0x58] sm:$0xff]
    %v44 = vld [vmem:[%s3 + $0x60] sm:$0xff]
    %v45 = vld [vmem:[%s3 + $0x68] sm:$0xff]
    %v46 = vld [vmem:[%s3 + $0x70] sm:$0xff]
    %v47 = vld [vmem:[%s3 + $0x78] sm:$0xff]
    %v48 = vld [vmem:[%s3 + $0x80] sm:$0xff]
    %v49 = vld [vmem:[%s3 + $0x88] sm:$0x1]
    %vm50 = vcmask 269312
    %v52 = vsel %vm50, %v27, 0
    %v55 = vsel %vm50, %v28, 0
    %vm57 = vcmask 1040384
    %v59 = vsel %vm57, %v36, 0
    %61 = vmatprep.subr.mxu0 0.0
    %62 = vmatpush1.msra.mxu0 %v32
    %63 = vmatprep.subr.mxu0 0.0
    %64 = vmatpush1.msra.mxu0 %v33
    %65 = vmatprep.subr.mxu0 0.0
    %66 = vmatpush1.msra.mxu0 %v34
    %67 = vmatprep.subr.mxu0 0.0
    %68 = vmatpush1.msra.mxu0 %v35
    %69 = vmatprep.subr.mxu0 0.0
    %70 = vmatpush1.msra.mxu0 %v59
    %71 = vmatprep.subr.mxu0 0.0
    %72 = vmatpush1.msra.mxu0 0.0
    %73 = vmatprep.subr.mxu0 0.0
    %74 = vmatpush1.msra.mxu0 0.0
    %75 = vmatprep.subr.mxu0 0.0
    %76 = vmatpush1.msra.mxu0 0.0
    %77 = vmatprep.subr.mxu0 0.0
    %78 = vmatpush1.msra.mxu0 0.0
    %79 = vmatprep.subr.mxu0 0.0
    %80 = vmatpush1.msra.mxu0 0.0
    %81 = vmatprep.subr.mxu0 0.0
    %82 = vmatpush1.msra.mxu0 0.0
    %83 = vmatprep.subr.mxu0 0.0
    %84 = vmatpush1.msra.mxu0 0.0
    %85 = vmatprep.subr.mxu0 0.0
    %86 = vmatpush1.msra.mxu0 0.0
    %87 = vmatprep.subr.mxu0 0.0
    %88 = vmatpush1.msra.mxu0 0.0
    %89 = vmatprep.subr.mxu0 0.0
    %90 = vmatpush1.msra.mxu0 0.0
    %91 = vmatprep.subr.mxu0 0.0
    %92 = vmatpush1.msra.mxu0 0.0
    %93 = vmatprep.subr.mxu0 0.0
    %94 = vmatpush1.msra.mxu0 0.0
    %95 = vmatprep.subr.mxu0 0.0
    %96 = vmatpush1.msra.mxu0 0.0
    %97 = vmatprep.subr.mxu0 0.0
    %98 = vmatpush1.msra.mxu0 0.0
    %99 = vmatprep.subr.mxu0 0.0
    %100 = vmatpush1.msra.mxu0 0.0
    %101 = vmatprep.subr.mxu0 0.0
    %102 = vmatpush1.msra.mxu0 0.0
    %103 = vmatprep.subr.mxu0 0.0
    %104 = vmatpush1.msra.mxu0 0.0
    %105 = vmatprep.subr.mxu0 0.0
    %106 = vmatpush1.msra.mxu0 0.0
    %107 = vmatprep.subr.mxu0 0.0
    %108 = vmatpush1.msra.mxu0 0.0
    %109 = vmatprep.subr.mxu0 0.0
    %110 = vmatpush1.msra.mxu0 0.0
    %111 = vmatprep.subr.mxu0 0.0
    %112 = vmatpush1.msra.mxu0 0.0
    %113 = vmatprep.subr.mxu0 0.0
    %114 = vmatpush1.msra.mxu0 0.0
    %115 = vmatprep.subr.mxu0 0.0
    %116 = vmatpush1.msra.mxu0 0.0
    %117 = vmatprep.subr.mxu0 0.0
    %118 = vmatpush1.msra.mxu0 0.0
    %119 = vmatprep.subr.mxu0 0.0
    %120 = vmatpush1.msra.mxu0 0.0
    %121 = vmatprep.subr.mxu0 0.0
    %122 = vmatpush1.msra.mxu0 0.0
    %123 = vmatprep.subr.mxu0 0.0
    %124 = vmatpush1.msra.mxu0 0.0
    %125 = vmatprep.mubr.f32.mxu0 0.0
    %126 = vmatmul.mubr.f32.gmra.mrb[0].mxu0 %v52
    %v127 = vpop.f32.mrb[0].mxu0
    %v128 = vadd.f32 0.0, %v127
    %v129 = vpop.f32.mrb[0].mxu0
    %130 = vmatprep.mubr.f32.mxu0 0.0
    %131 = vmatmul.mubr.f32.gmra.mrb[0].mxu0 %v55
    %v132 = vpop.f32.mrb[0].mxu0
    %v133 = vadd.f32 0.0, %v132
    %v134 = vpop.f32.mrb[0].mxu0
    %135 = vdwg.mxu0
    %vm136 = vcmask 130048
    %v138 = vsel %vm136, %v29, 0
    %v141 = vsel %vm136, %v30, 0
    %143 = vmatprep.subr.mxu0 0.0
    %144 = vmatpush1.msra.mxu0 %v128
    %145 = vmatprep.subr.mxu0 0.0
    %146 = vmatpush1.msra.mxu0 %v133
    %147 = vmatprep.subr.mxu0 0.0
    %148 = vmatpush1.msra.mxu0 0.0
    %149 = vmatprep.subr.mxu0 0.0
    %150 = vmatpush1.msra.mxu0 0.0
    %151 = vmatprep.subr.mxu0 0.0
    %152 = vmatpush1.msra.mxu0 0.0
    %153 = vmatprep.subr.mxu0 0.0
    %154 = vmatpush1.msra.mxu0 0.0
    %155 = vmatprep.subr.mxu0 0.0
    %156 = vmatpush1.msra.mxu0 0.0
    %157 = vmatprep.subr.mxu0 0.0
    %158 = vmatpush1.msra.mxu0 0.0
    %159 = vmatprep.subr.mxu0 0.0
    %160 = vmatpush1.msra.mxu0 0.0
    %161 = vmatprep.subr.mxu0 0.0
    %162 = vmatpush1.msra.mxu0 0.0
    %163 = vmatprep.subr.mxu0 0.0
    %164 = vmatpush1.msra.mxu0 0.0
    %165 = vmatprep.subr.mxu0 0.0
    %166 = vmatpush1.msra.mxu0 0.0
    %167 = vmatprep.subr.mxu0 0.0
    %168 = vmatpush1.msra.mxu0 0.0
    %169 = vmatprep.subr.mxu0 0.0
    %170 = vmatpush1.msra.mxu0 0.0
    %171 = vmatprep.subr.mxu0 0.0
    %172 = vmatpush1.msra.mxu0 0.0
    %173 = vmatprep.subr.mxu0 0.0
    %174 = vmatpush1.msra.mxu0 0.0
    %175 = vmatprep.subr.mxu0 0.0
    %176 = vmatpush1.msra.mxu0 0.0
    %177 = vmatprep.subr.mxu0 0.0
    %178 = vmatpush1.msra.mxu0 0.0
    %179 = vmatprep.subr.mxu0 0.0
    %180 = vmatpush1.msra.mxu0 0.0
    %181 = vmatprep.subr.mxu0 0.0
    %182 = vmatpush1.msra.mxu0 0.0
    %183 = vmatprep.subr.mxu0 0.0
    %184 = vmatpush1.msra.mxu0 0.0
    %185 = vmatprep.subr.mxu0 0.0
    %186 = vmatpush1.msra.mxu0 0.0
    %187 = vmatprep.subr.mxu0 0.0
    %188 = vmatpush1.msra.mxu0 0.0
    %189 = vmatprep.subr.mxu0 0.0
    %190 = vmatpush1.msra.mxu0 0.0
    %191 = vmatprep.subr.mxu0 0.0
    %192 = vmatpush1.msra.mxu0 0.0
    %193 = vmatprep.subr.mxu0 0.0
    %194 = vmatpush1.msra.mxu0 0.0
    %195 = vmatprep.subr.mxu0 0.0
    %196 = vmatpush1.msra.mxu0 0.0
    %197 = vmatprep.subr.mxu0 0.0
    %198 = vmatpush1.msra.mxu0 0.0
    %199 = vmatprep.subr.mxu0 0.0
    %200 = vmatpush1.msra.mxu0 0.0
    %201 = vmatprep.subr.mxu0 0.0
    %202 = vmatpush1.msra.mxu0 0.0
    %203 = vmatprep.subr.mxu0 0.0
    %204 = vmatpush1.msra.mxu0 0.0
    %205 = vmatprep.subr.mxu0 0.0
    %206 = vmatpush1.msra.mxu0 0.0
    %207 = vmatprep.mubr.f32.mxu0 0.0
    %208 = vmatmul.mubr.f32.gmra.mrb[0].mxu0 %v138
    %v209 = vpop.f32.mrb[0].mxu0
    %v210 = vadd.f32 0.0, %v209
    %v211 = vpop.f32.mrb[0].mxu0
    %212 = vmatprep.mubr.f32.mxu0 0.0
    %213 = vmatmul.mubr.f32.gmra.mrb[0].mxu0 %v141
    %v214 = vpop.f32.mrb[0].mxu0
    %v215 = vadd.f32 0.0, %v214
    %v216 = vpop.f32.mrb[0].mxu0
    %217 = vdwg.mxu0
    %v218 = vlaneseq
    %v219 = vand.u32 %v218, 127
    %v220 = vlaneseq
    %v221 = vshrl.u32 %v220, 7
    %vm222 = vcmp.eq.s32.totalorder %v221, 0
    %s223 = sld [smem:[#allocation3]]
    %v224 = vstv %s223
    %vm225 = vcmp.eq.s32.totalorder %v219, %v224
    %vm226 = vmand %vm222, %vm225
    %v227 = vsel %vm226, 1.0, 0.0
    %s228 = sld [smem:[#allocation3 + $0x2]]
    %v229 = vstv %s228
    %vm230 = vcmp.eq.s32.totalorder %v219, %v229
    %vm231 = vmand %vm222, %vm230
    %v232 = vsel %vm231, 1.0, 0.0
    %vm233 = vcmp.eq.s32.totalorder %v221, 1
    %s234 = sld [smem:[#allocation3 + $0x1]]
    %v235 = vstv %s234
    %vm236 = vcmp.eq.s32.totalorder %v219, %v235
    %vm237 = vmand %vm233, %vm236
    %v238 = vsel %vm237, 1.0, %v227
    %s239 = sld [smem:[#allocation3 + $0x3]]
    %v240 = vstv %s239
    %vm241 = vcmp.eq.s32.totalorder %v219, %v240
    %vm242 = vmand %vm233, %vm241
    %v243 = vsel %vm242, 1.0, %v232
    %v245 = vsel %vm136, %v238, 0
    %247 = vmatprep.subr.mxu0 0.0
    %248 = vmatpush1.msra.mxu0 %v210
    %249 = vmatprep.subr.mxu0 0.0
    %250 = vmatpush1.msra.mxu0 %v215
    %251 = vmatprep.subr.mxu0 0.0
    %252 = vmatpush1.msra.mxu0 0.0
    %253 = vmatprep.subr.mxu0 0.0
    %254 = vmatpush1.msra.mxu0 0.0
    %255 = vmatprep.subr.mxu0 0.0
    %256 = vmatpush1.msra.mxu0 0.0
    %257 = vmatprep.subr.mxu0 0.0
    %258 = vmatpush1.msra.mxu0 0.0
    %259 = vmatprep.subr.mxu0 0.0
    %260 = vmatpush1.msra.mxu0 0.0
    %261 = vmatprep.subr.mxu0 0.0
    %262 = vmatpush1.msra.mxu0 0.0
    %263 = vmatprep.subr.mxu0 0.0
    %264 = vmatpush1.msra.mxu0 0.0
    %265 = vmatprep.subr.mxu0 0.0
    %266 = vmatpush1.msra.mxu0 0.0
    %267 = vmatprep.subr.mxu0 0.0
    %268 = vmatpush1.msra.mxu0 0.0
    %269 = vmatprep.subr.mxu0 0.0
    %270 = vmatpush1.msra.mxu0 0.0
    %271 = vmatprep.subr.mxu0 0.0
    %272 = vmatpush1.msra.mxu0 0.0
    %273 = vmatprep.subr.mxu0 0.0
    %274 = vmatpush1.msra.mxu0 0.0
    %275 = vmatprep.subr.mxu0 0.0
    %276 = vmatpush1.msra.mxu0 0.0
    %277 = vmatprep.subr.mxu0 0.0
    %278 = vmatpush1.msra.mxu0 0.0
    %279 = vmatprep.subr.mxu0 0.0
    %280 = vmatpush1.msra.mxu0 0.0
    %281 = vmatprep.subr.mxu0 0.0
    %282 = vmatpush1.msra.mxu0 0.0
    %283 = vmatprep.subr.mxu0 0.0
    %284 = vmatpush1.msra.mxu0 0.0
    %285 = vmatprep.subr.mxu0 0.0
    %286 = vmatpush1.msra.mxu0 0.0
    %287 = vmatprep.subr.mxu0 0.0
    %288 = vmatpush1.msra.mxu0 0.0
    %289 = vmatprep.subr.mxu0 0.0
    %290 = vmatpush1.msra.mxu0 0.0
    %291 = vmatprep.subr.mxu0 0.0
    %292 = vmatpush1.msra.mxu0 0.0
    %293 = vmatprep.subr.mxu0 0.0
    %294 = vmatpush1.msra.mxu0 0.0
    %295 = vmatprep.subr.mxu0 0.0
    %296 = vmatpush1.msra.mxu0 0.0
    %297 = vmatprep.subr.mxu0 0.0
    %298 = vmatpush1.msra.mxu0 0.0
    %299 = vmatprep.subr.mxu0 0.0
    %300 = vmatpush1.msra.mxu0 0.0
    %301 = vmatprep.subr.mxu0 0.0
    %302 = vmatpush1.msra.mxu0 0.0
    %303 = vmatprep.subr.mxu0 0.0
    %304 = vmatpush1.msra.mxu0 0.0
    %305 = vmatprep.subr.mxu0 0.0
    %306 = vmatpush1.msra.mxu0 0.0
    %307 = vmatprep.subr.mxu0 0.0
    %308 = vmatpush1.msra.mxu0 0.0
    %309 = vmatprep.subr.mxu0 0.0
    %310 = vmatpush1.msra.mxu0 0.0
    %311 = vmatprep.mubr.f32.mxu0 0.0
    %312 = vmatmul.mubr.f32.gmra.mrb[0].mxu0 %v245
    %v313 = vpop.f32.mrb[0].mxu0
    %v314 = vadd.f32 0.0, %v313
    %v315 = vpop.f32.mrb[0].mxu0
    %316 = vdwg.mxu0
    %v318 = vsel %vm136, %v243, 0
    %320 = vmatprep.subr.mxu0 0.0
    %321 = vmatpush1.msra.mxu0 %v210
    %322 = vmatprep.subr.mxu0 0.0
    %323 = vmatpush1.msra.mxu0 %v215
    %324 = vmatprep.subr.mxu0 0.0
    %325 = vmatpush1.msra.mxu0 0.0
    %326 = vmatprep.subr.mxu0 0.0
    %327 = vmatpush1.msra.mxu0 0.0
    %328 = vmatprep.subr.mxu0 0.0
    %329 = vmatpush1.msra.mxu0 0.0
    %330 = vmatprep.subr.mxu0 0.0
    %331 = vmatpush1.msra.mxu0 0.0
    %332 = vmatprep.subr.mxu0 0.0
    %333 = vmatpush1.msra.mxu0 0.0
    %334 = vmatprep.subr.mxu0 0.0
    %335 = vmatpush1.msra.mxu0 0.0
    %336 = vmatprep.subr.mxu0 0.0
    %337 = vmatpush1.msra.mxu0 0.0
    %338 = vmatprep.subr.mxu0 0.0
    %339 = vmatpush1.msra.mxu0 0.0
    %340 = vmatprep.subr.mxu0 0.0
    %341 = vmatpush1.msra.mxu0 0.0
    %342 = vmatprep.subr.mxu0 0.0
    %343 = vmatpush1.msra.mxu0 0.0
    %344 = vmatprep.subr.mxu0 0.0
    %345 = vmatpush1.msra.mxu0 0.0
    %346 = vmatprep.subr.mxu0 0.0
    %347 = vmatpush1.msra.mxu0 0.0
    %348 = vmatprep.subr.mxu0 0.0
    %349 = vmatpush1.msra.mxu0 0.0
    %350 = vmatprep.subr.mxu0 0.0
    %351 = vmatpush1.msra.mxu0 0.0
    %352 = vmatprep.subr.mxu0 0.0
    %353 = vmatpush1.msra.mxu0 0.0
    %354 = vmatprep.subr.mxu0 0.0
    %355 = vmatpush1.msra.mxu0 0.0
    %356 = vmatprep.subr.mxu0 0.0
    %357 = vmatpush1.msra.mxu0 0.0
    %358 = vmatprep.subr.mxu0 0.0
    %359 = vmatpush1.msra.mxu0 0.0
    %360 = vmatprep.subr.mxu0 0.0
    %361 = vmatpush1.msra.mxu0 0.0
    %362 = vmatprep.subr.mxu0 0.0
    %363 = vmatpush1.msra.mxu0 0.0
    %364 = vmatprep.subr.mxu0 0.0
    %365 = vmatpush1.msra.mxu0 0.0
    %366 = vmatprep.subr.mxu0 0.0
    %367 = vmatpush1.msra.mxu0 0.0
    %368 = vmatprep.subr.mxu0 0.0
    %369 = vmatpush1.msra.mxu0 0.0
    %370 = vmatprep.subr.mxu0 0.0
    %371 = vmatpush1.msra.mxu0 0.0
    %372 = vmatprep.subr.mxu0 0.0
    %373 = vmatpush1.msra.mxu0 0.0
    %374 = vmatprep.subr.mxu0 0.0
    %375 = vmatpush1.msra.mxu0 0.0
    %376 = vmatprep.subr.mxu0 0.0
    %377 = vmatpush1.msra.mxu0 0.0
    %378 = vmatprep.subr.mxu0 0.0
    %379 = vmatpush1.msra.mxu0 0.0
    %380 = vmatprep.subr.mxu0 0.0
    %381 = vmatpush1.msra.mxu0 0.0
    %382 = vmatprep.subr.mxu0 0.0
    %383 = vmatpush1.msra.mxu0 0.0
    %384 = vmatprep.mubr.f32.mxu0 0.0
    %385 = vmatmul.mubr.f32.gmra.mrb[0].mxu0 %v318
    %v386 = vpop.f32.mrb[0].mxu0
    %v387 = vadd.f32 0.0, %v386
    %v388 = vpop.f32.mrb[0].mxu0
    %389 = vdwg.mxu0
    %vm390 = vcmask 261120
    %v392 = vsel %vm390, %v387, 0
    %394 = vmatprep.subr.mxu0 0.0
    %395 = vmatpush1.msra.mxu0 %v41
    %396 = vmatprep.subr.mxu0 0.0
    %397 = vmatpush1.msra.mxu0 %v42
    %398 = vmatprep.subr.mxu0 0.0
    %399 = vmatpush1.msra.mxu0 %v43
    %400 = vmatprep.subr.mxu0 0.0
    %401 = vmatpush1.msra.mxu0 %v44
    %402 = vmatprep.subr.mxu0 0.0
    %403 = vmatpush1.msra.mxu0 0.0
    %404 = vmatprep.subr.mxu0 0.0
    %405 = vmatpush1.msra.mxu0 0.0
    %406 = vmatprep.subr.mxu0 0.0
    %407 = vmatpush1.msra.mxu0 0.0
    %408 = vmatprep.subr.mxu0 0.0
    %409 = vmatpush1.msra.mxu0 0.0
    %410 = vmatprep.subr.mxu0 0.0
    %411 = vmatpush1.msra.mxu0 0.0
    %412 = vmatprep.subr.mxu0 0.0
    %413 = vmatpush1.msra.mxu0 0.0
    %414 = vmatprep.subr.mxu0 0.0
    %415 = vmatpush1.msra.mxu0 0.0
    %416 = vmatprep.subr.mxu0 0.0
    %417 = vmatpush1.msra.mxu0 0.0
    %418 = vmatprep.subr.mxu0 0.0
    %419 = vmatpush1.msra.mxu0 0.0
    %420 = vmatprep.subr.mxu0 0.0
    %421 = vmatpush1.msra.mxu0 0.0
    %422 = vmatprep.subr.mxu0 0.0
    %423 = vmatpush1.msra.mxu0 0.0
    %424 = vmatprep.subr.mxu0 0.0
    %425 = vmatpush1.msra.mxu0 0.0
    %426 = vmatprep.subr.mxu0 0.0
    %427 = vmatpush1.msra.mxu0 0.0
    %428 = vmatprep.subr.mxu0 0.0
    %429 = vmatpush1.msra.mxu0 0.0
    %430 = vmatprep.subr.mxu0 0.0
    %431 = vmatpush1.msra.mxu0 0.0
    %432 = vmatprep.subr.mxu0 0.0
    %433 = vmatpush1.msra.mxu0 0.0
    %434 = vmatprep.subr.mxu0 0.0
    %435 = vmatpush1.msra.mxu0 0.0
    %436 = vmatprep.subr.mxu0 0.0
    %437 = vmatpush1.msra.mxu0 0.0
    %438 = vmatprep.subr.mxu0 0.0
    %439 = vmatpush1.msra.mxu0 0.0
    %440 = vmatprep.subr.mxu0 0.0
    %441 = vmatpush1.msra.mxu0 0.0
    %442 = vmatprep.subr.mxu0 0.0
    %443 = vmatpush1.msra.mxu0 0.0
    %444 = vmatprep.subr.mxu0 0.0
    %445 = vmatpush1.msra.mxu0 0.0
    %446 = vmatprep.subr.mxu0 0.0
    %447 = vmatpush1.msra.mxu0 0.0
    %448 = vmatprep.subr.mxu0 0.0
    %449 = vmatpush1.msra.mxu0 0.0
    %450 = vmatprep.subr.mxu0 0.0
    %451 = vmatpush1.msra.mxu0 0.0
    %452 = vmatprep.subr.mxu0 0.0
    %453 = vmatpush1.msra.mxu0 0.0
    %454 = vmatprep.subr.mxu0 0.0
    %455 = vmatpush1.msra.mxu0 0.0
    %456 = vmatprep.subr.mxu0 0.0
    %457 = vmatpush1.msra.mxu0 0.0
    %458 = vmatprep.mubr.f32.mxu0 0.0
    %459 = vmatmul.mubr.f32.gmra.mrb[0].mxu0 %v392
    %v460 = vpop.f32.mrb[0].mxu0
    %v461 = vadd.f32 0.0, %v460
    %v462 = vpop.f32.mrb[0].mxu0
    %463 = vdwg.mxu0
    %v465 = vsel %vm390, %v314, 0
    %467 = vmatprep.subr.mxu0 0.0
    %468 = vmatpush1.msra.mxu0 %v37
    %469 = vmatprep.subr.mxu0 0.0
    %470 = vmatpush1.msra.mxu0 %v38
    %471 = vmatprep.subr.mxu0 0.0
    %472 = vmatpush1.msra.mxu0 %v39
    %473 = vmatprep.subr.mxu0 0.0
    %474 = vmatpush1.msra.mxu0 %v40
    %475 = vmatprep.subr.mxu0 0.0
    %476 = vmatpush1.msra.mxu0 0.0
    %477 = vmatprep.subr.mxu0 0.0
    %478 = vmatpush1.msra.mxu0 0.0
    %479 = vmatprep.subr.mxu0 0.0
    %480 = vmatpush1.msra.mxu0 0.0
    %481 = vmatprep.subr.mxu0 0.0
    %482 = vmatpush1.msra.mxu0 0.0
    %483 = vmatprep.subr.mxu0 0.0
    %484 = vmatpush1.msra.mxu0 0.0
    %485 = vmatprep.subr.mxu0 0.0
    %486 = vmatpush1.msra.mxu0 0.0
    %487 = vmatprep.subr.mxu0 0.0
    %488 = vmatpush1.msra.mxu0 0.0
    %489 = vmatprep.subr.mxu0 0.0
    %490 = vmatpush1.msra.mxu0 0.0
    %491 = vmatprep.subr.mxu0 0.0
    %492 = vmatpush1.msra.mxu0 0.0
    %493 = vmatprep.subr.mxu0 0.0
    %494 = vmatpush1.msra.mxu0 0.0
    %495 = vmatprep.subr.mxu0 0.0
    %496 = vmatpush1.msra.mxu0 0.0
    %497 = vmatprep.subr.mxu0 0.0
    %498 = vmatpush1.msra.mxu0 0.0
    %499 = vmatprep.subr.mxu0 0.0
    %500 = vmatpush1.msra.mxu0 0.0
    %501 = vmatprep.subr.mxu0 0.0
    %502 = vmatpush1.msra.mxu0 0.0
    %503 = vmatprep.subr.mxu0 0.0
    %504 = vmatpush1.msra.mxu0 0.0
    %505 = vmatprep.subr.mxu0 0.0
    %506 = vmatpush1.msra.mxu0 0.0
    %507 = vmatprep.subr.mxu0 0.0
    %508 = vmatpush1.msra.mxu0 0.0
    %509 = vmatprep.subr.mxu0 0.0
    %510 = vmatpush1.msra.mxu0 0.0
    %511 = vmatprep.subr.mxu0 0.0
    %512 = vmatpush1.msra.mxu0 0.0
    %513 = vmatprep.subr.mxu0 0.0
    %514 = vmatpush1.msra.mxu0 0.0
    %515 = vmatprep.subr.mxu0 0.0
    %516 = vmatpush1.msra.mxu0 0.0
    %517 = vmatprep.subr.mxu0 0.0
    %518 = vmatpush1.msra.mxu0 0.0
    %519 = vmatprep.subr.mxu0 0.0
    %520 = vmatpush1.msra.mxu0 0.0
    %521 = vmatprep.subr.mxu0 0.0
    %522 = vmatpush1.msra.mxu0 0.0
    %523 = vmatprep.subr.mxu0 0.0
    %524 = vmatpush1.msra.mxu0 0.0
    %525 = vmatprep.subr.mxu0 0.0
    %526 = vmatpush1.msra.mxu0 0.0
    %527 = vmatprep.subr.mxu0 0.0
    %528 = vmatpush1.msra.mxu0 0.0
    %529 = vmatprep.subr.mxu0 0.0
    %530 = vmatpush1.msra.mxu0 0.0
    %531 = vmatprep.mubr.f32.mxu0 0.0
    %532 = vmatmul.mubr.f32.gmra.mrb[0].mxu0 %v465
    %v533 = vpop.f32.mrb[0].mxu0
    %v534 = vadd.f32 %v461, %v533
    %v535 = vpop.f32.mrb[0].mxu0
    %536 = vdwg.mxu0
    %v538 = vsel %vm50, %v31, 0
    %v541 = vsel %vm57, %v49, 0
    %543 = vmatprep.subr.mxu0 0.0
    %544 = vmatpush1.msra.mxu0 %v45
    %545 = vmatprep.subr.mxu0 0.0
    %546 = vmatpush1.msra.mxu0 %v46
    %547 = vmatprep.subr.mxu0 0.0
    %548 = vmatpush1.msra.mxu0 %v47
    %549 = vmatprep.subr.mxu0 0.0
    %550 = vmatpush1.msra.mxu0 %v48
    %551 = vmatprep.subr.mxu0 0.0
    %552 = vmatpush1.msra.mxu0 %v541
    %553 = vmatprep.subr.mxu0 0.0
    %554 = vmatpush1.msra.mxu0 0.0
    %555 = vmatprep.subr.mxu0 0.0
    %556 = vmatpush1.msra.mxu0 0.0
    %557 = vmatprep.subr.mxu0 0.0
    %558 = vmatpush1.msra.mxu0 0.0
    %559 = vmatprep.subr.mxu0 0.0
    %560 = vmatpush1.msra.mxu0 0.0
    %561 = vmatprep.subr.mxu0 0.0
    %562 = vmatpush1.msra.mxu0 0.0
    %563 = vmatprep.subr.mxu0 0.0
    %564 = vmatpush1.msra.mxu0 0.0
    %565 = vmatprep.subr.mxu0 0.0
    %566 = vmatpush1.msra.mxu0 0.0
    %567 = vmatprep.subr.mxu0 0.0
    %568 = vmatpush1.msra.mxu0 0.0
    %569 = vmatprep.subr.mxu0 0.0
    %570 = vmatpush1.msra.mxu0 0.0
    %571 = vmatprep.subr.mxu0 0.0
    %572 = vmatpush1.msra.mxu0 0.0
    %573 = vmatprep.subr.mxu0 0.0
    %574 = vmatpush1.msra.mxu0 0.0
    %575 = vmatprep.subr.mxu0 0.0
    %576 = vmatpush1.msra.mxu0 0.0
    %577 = vmatprep.subr.mxu0 0.0
    %578 = vmatpush1.msra.mxu0 0.0
    %579 = vmatprep.subr.mxu0 0.0
    %580 = vmatpush1.msra.mxu0 0.0
    %581 = vmatprep.subr.mxu0 0.0
    %582 = vmatpush1.msra.mxu0 0.0
    %583 = vmatprep.subr.mxu0 0.0
    %584 = vmatpush1.msra.mxu0 0.0
    %585 = vmatprep.subr.mxu0 0.0
    %586 = vmatpush1.msra.mxu0 0.0
    %587 = vmatprep.subr.mxu0 0.0
    %588 = vmatpush1.msra.mxu0 0.0
    %589 = vmatprep.subr.mxu0 0.0
    %590 = vmatpush1.msra.mxu0 0.0
    %591 = vmatprep.subr.mxu0 0.0
    %592 = vmatpush1.msra.mxu0 0.0
    %593 = vmatprep.subr.mxu0 0.0
    %594 = vmatpush1.msra.mxu0 0.0
    %595 = vmatprep.subr.mxu0 0.0
    %596 = vmatpush1.msra.mxu0 0.0
    %597 = vmatprep.subr.mxu0 0.0
    %598 = vmatpush1.msra.mxu0 0.0
    %599 = vmatprep.subr.mxu0 0.0
    %600 = vmatpush1.msra.mxu0 0.0
    %601 = vmatprep.subr.mxu0 0.0
    %602 = vmatpush1.msra.mxu0 0.0
    %603 = vmatprep.subr.mxu0 0.0
    %604 = vmatpush1.msra.mxu0 0.0
    %605 = vmatprep.subr.mxu0 0.0
    %606 = vmatpush1.msra.mxu0 0.0
    %607 = vmatprep.mubr.f32.mxu0 0.0
    %608 = vmatmul.mubr.f32.gmra.mrb[0].mxu0 %v538
    %v609 = vpop.f32.mrb[0].mxu0
    %v610 = vadd.f32 0.0, %v609
    %v611 = vpop.f32.mrb[0].mxu0
    %612 = vdwg.mxu0
    %v613 = vadd.f32 %v534, %v610
    %vm614 = vcmask 25600
    %615 = vst.msk [vmem:[#allocation8] sm:$0x3] %vm614, %v613
    %v616 = vsel %vm614, %v613, -inf
    %617 = vmax.xlane.f32.xlu0 %v616
    %v618 = vpop.xlane.xlu0 %617
    %v619 = vsub.f32 %v613, %v618
    %v620 = vmul.f32 %v619, 1.442695
    %v621 = vpow.pop %v620
    %v622 = vsel %vm614, %v621, 0.0
    %623 = vadd.xlane.f32.xlu0 %v622
    %v624 = vpop.xlane.xlu0 %623
    %v625 = vlog2.pop %v624
    %v626 = vmul.f32 %v625, 0.6931472
    %v627 = vadd.f32 %v618, %v626
    %s628 = sld [smem:[#allocation4]]
    %v629 = vstv %s628
    %v630 = vsel %vm222, %v629, 4294967295
    %s631 = sld [smem:[#allocation4 + $0x1]]
    %v632 = vstv %s631
    %v633 = vsel %vm233, %v632, %v630
    %vm634 = vcmp.eq.s32.totalorder %v219, %v633
    %v635 = vsel %vm634, %v613, 0.0
    %v636 = vsel %vm614, %v635, 0.0
    %637 = vadd.xlane.f32.xlu0 %v636
    %v638 = vpop.xlane.xlu0 %637
    %v639 = vsub.f32 %v627, %v638
    %vm640 = vcmask 1024
    %v641 = vsel %vm640, %v639, 0.0
    %642 = vadd.xlane.f32.xlu0 %v641
    %v643 = vpop.xlane.xlu0 %642
    %v644 = vrot.slane %v643, 4
    %v645 = vadd.f32 %v643, %v644
    %v646 = vrot.slane %v645, 2
    %v647 = vadd.f32 %v645, %v646
    %v648 = vrot.slane %v647, 1
    %v649 = vadd.f32 %v647, %v648
    %s650 = vtos %v649
    %s651 = smul.f32 %s650, 0.5
    %s652 = scalar_lea.smem [#allocation5], 0
    %653 = sst [smem:[%s652]] %s651
    // Predicated region
    $region10: #{tpu_custom_call.1} parent=1 // pred_check
      _
    $region11: #{tpu_custom_call.1} parent=1 // pred_check_branch
      %655 = sbr.rel (0) target = $region13
    $region12: #{tpu_custom_call.1} parent=1 // pred_region
      %s657 = ssub.s32 16, 16
      %658 = vsyncadd [#allocation7], %s657
      %661 = dma.smem_to_hbm [#allocation5], 16, %s4, [#allocation7]
    $region13: #{tpu_custom_call.1} parent=1 // pred_fallthru
      _
    // Predicated region
    $region14: #{tpu_custom_call.1} parent=1 // pred_check
      _
    $region15: #{tpu_custom_call.1} parent=1 // pred_check_branch
      %663 = sbr.rel (0) target = $region17
    $region16: #{tpu_custom_call.1} parent=1 // pred_region
      %s665 = ssub.s32 32, 32
      %666 = vsyncadd [#allocation6], %s665
      %s668 = sshll.u32 [#allocation8], 4
      %s669 = int_to_ptr.vmem [resolvable:$true] %s668
      %671 = dma.vmem_to_hbm [thread:$0]  %s669, 32, %s5, [#allocation6]
    $region17: #{tpu_custom_call.1} parent=1 // pred_fallthru
      _
    // Predicated region
    $region18: #{tpu_custom_call.1} parent=1 // pred_check
      _
    $region19: #{tpu_custom_call.1} parent=1 // pred_check_branch
      %673 = sbr.rel (0) target = $region21
    $region20: #{tpu_custom_call.1} parent=1 // pred_region
      %674 = dma.done [#allocation7], 16
    $region21: #{tpu_custom_call.1} parent=1 // pred_fallthru
      _
    // Predicated region
    $region22: #{tpu_custom_call.1} parent=1 // pred_check
      _
    $region23: #{tpu_custom_call.1} parent=1 // pred_check_branch
      %676 = sbr.rel (0) target = $region25
    $region24: #{tpu_custom_call.1} parent=1 // pred_region
      %677 = dma.done [#allocation6], 32
    $region25: #{tpu_custom_call.1} parent=1 // pred_fallthru
      _
    %678 = sfence
    %679 = vsyncpa [#allocation6], 1
    %680 = vsyncpa [#allocation7], 1

</llo_original>
